<compile_context>
chip_gen: v5e
topology: v5e:2x2
jax: 0.10.0
libtpu: 0.0.40
codegen_flags: <defaults>
</compile_context>

<pallas_src>
import functools
import math

import jax
import jax.numpy as jnp
from jax.experimental import pallas as pl
from jax.experimental.pallas import tpu as pltpu


VMEM_LIMIT_BYTES = 32 * 1024 * 1024   # safe scoped-VMEM cap on v5e/v6e/v7x
MATMUL_ROW_TILE = 512                 # ~85% of HBM roofline per the tile sweep


def _relu6(x):
    return jnp.minimum(jnp.maximum(x, 0.0), 6.0)


def _compiler_params(*semantics):
    return pltpu.CompilerParams(dimension_semantics=semantics,
                                vmem_limit_bytes=VMEM_LIMIT_BYTES)


# --------------------------- tiled 1x1-conv matmul ---------------------------

def _mm_kernel(x_ref, w_ref, b_ref, o_ref, *, act):
    y = jnp.dot(x_ref[...], w_ref[...], preferred_element_type=jnp.float32)
    y = y + b_ref[...]
    if act:
        y = _relu6(y)
    o_ref[...] = y.astype(o_ref.dtype)


def pallas_matmul(x, w, b, *, act, out_dtype=jnp.bfloat16):
    """1x1 conv over flattened spatial positions: x @ w + b (+ ReLU6)."""
    M, K = x.shape
    Cout = w.shape[1]
    tm = M if M <= MATMUL_ROW_TILE else MATMUL_ROW_TILE
    tc = 256 if (Cout % 256 == 0 and Cout > 256) else Cout   # 256-lane Cout tiles
    return pl.pallas_call(
        functools.partial(_mm_kernel, act=act),
        out_shape=jax.ShapeDtypeStruct((M, Cout), out_dtype),
        grid=(pl.cdiv(M, tm), Cout // tc),
        in_specs=[pl.BlockSpec((tm, K), lambda i, j: (i, 0)),
                  pl.BlockSpec((K, tc), lambda i, j: (0, j)),
                  pl.BlockSpec((1, tc), lambda i, j: (0, j))],
        out_specs=pl.BlockSpec((tm, tc), lambda i, j: (i, j)),
        compiler_params=_compiler_params("parallel", "parallel"),
    )(x, w, b)


# ------------------- fused inverted-residual block kernel --------------------

def _fused_ir_kernel(*refs, stride, th, H, W, has_expand, use_res):
    """One (image, row-strip) grid step of expand -> dw3x3 -> proj (+res)."""
    n_planes = 1 if stride == 1 else 2
    i = 0
    planes = refs[i:i + n_planes]; i += n_planes
    if has_expand:
        ew_ref, eb_ref = refs[i], refs[i + 1]; i += 2
    dww_ref, dwb_ref, pw_ref, pb_ref = refs[i:i + 4]; i += 4
    o_ref = refs[i]

    hs = pl.program_id(1)
    Wo = W // stride
    row0 = hs * th * stride                 # first padded hidden row needed
    n_rows = (th - 1) * stride + 3

    dww = dww_ref[...]                      # (9, Chid)  f32
    dwb = dwb_ref[...]                      # (1, Chid)  f32
    pw = pw_ref[...]                        # (Chid, Cout) bf16
    pb = pb_ref[...]                        # (1, Cout)  f32
    if has_expand:
        ew = ew_ref[...]                    # (Cin, Chid) bf16
        eb = eb_ref[...]                    # (1, Chid)  f32
        # zero-mask for the 1-pixel padded border (expand(0)+bias+ReLU6 != 0).
        col_masks = []
        for p in range(n_planes):
            wc = planes[p].shape[2]
            j = jax.lax.broadcasted_iota(jnp.int32, (wc, 1), 0)
            if stride == 1:
                valid = (j >= 1) & (j <= W)
            elif p == 0:                    # even padded columns 2j
                valid = j >= 1
            else:                           # odd padded columns 2j+1
                valid = j <= (W // 2 - 1)
            col_masks.append(valid.astype(jnp.float32))

    def hidden_row(p, r):
        xrow = planes[p][0, r]              # (Wc, Cin) bf16, padded row r
        if not has_expand:
            return xrow.astype(jnp.float32)  # borders already zero-padded
        h = _relu6(jnp.dot(xrow, ew, preferred_element_type=jnp.float32) + eb)
        rv = jnp.where((r >= 1) & (r <= H), 1.0, 0.0).astype(jnp.float32)
        return h * (col_masks[p] * rv)

    # hidden rows for this strip: stay in VMEM/vregs, never written to HBM
    hid = [[hidden_row(p, row0 + k) for p in range(n_planes)]
           for k in range(n_rows)]

    for t in range(th):
        acc = None
        for dh in range(3):
            rows = hid[t * stride + dh]
            for dwi in range(3):
                w_tap = dww[dh * 3 + dwi:dh * 3 + dwi + 1, :]     # (1, Chid)
                if stride == 1:
                    tap = rows[0][dwi:dwi + Wo, :]
                else:   # stride-2: column-parity planes -> unit-stride taps
                    tap = rows[dwi % 2][dwi // 2:dwi // 2 + Wo, :]
                term = tap * w_tap
                acc = term if acc is None else acc + term
        post = _relu6(acc + dwb).astype(jnp.bfloat16)             # (Wo, Chid)
        y = jnp.dot(post, pw, preferred_element_type=jnp.float32) + pb
        if use_res:
            xr = planes[0][0, hs * th + t + 1]                    # (W+2, Cin)
            y = y + xr[1:1 + W, :].astype(jnp.float32)
        o_ref[0, t] = y.astype(o_ref.dtype)


def _largest_divisor_at_most(n, cap):
    for d in range(min(cap, n), 0, -1):
        if n % d == 0:
            return d
    return 1


def fused_inverted_residual(x, blk):
    """x: (N, H, W, Cin) bf16 NHWC -> (N, H//s, W//s, Cout) bf16."""
    N, H, W, Cin = x.shape
    stride = blk['stride']
    has_expand = blk['expand_w'] is not None
    use_res = blk['use_res']
    Cout = blk['proj_w'].shape[1]
    assert not (use_res and stride != 1)
    if stride == 2:
        assert H % 2 == 0 and W % 2 == 0
    Ho, Wo = H // stride, W // stride
    th = _largest_divisor_at_most(Ho, 8)    # output rows per grid step

    xpad = jnp.pad(x, ((0, 0), (1, 1), (1, 1), (0, 0)))   # pad the *narrow* input
    if stride == 1:
        planes = [xpad]
    else:
        # column-parity planes so the kernel reads stride-2 taps with unit stride
        planes = [xpad[:, :, 0::2, :], xpad[:, :, 1::2, :]]

    operands = list(planes)
    in_specs = [pl.BlockSpec((1,) + p.shape[1:], lambda n, h: (n, 0, 0, 0))
                for p in planes]
    if has_expand:
        operands += [blk['expand_w'], blk['expand_b']]
        in_specs += [pl.BlockSpec(blk['expand_w'].shape, lambda n, h: (0, 0)),
                     pl.BlockSpec(blk['expand_b'].shape, lambda n, h: (0, 0))]
    operands += [blk['dw_w'], blk['dw_b'], blk['proj_w'], blk['proj_b']]
    in_specs += [pl.BlockSpec(blk['dw_w'].shape, lambda n, h: (0, 0)),
                 pl.BlockSpec(blk['dw_b'].shape, lambda n, h: (0, 0)),
                 pl.BlockSpec(blk['proj_w'].shape, lambda n, h: (0, 0)),
                 pl.BlockSpec(blk['proj_b'].shape, lambda n, h: (0, 0))]

    return pl.pallas_call(
        functools.partial(_fused_ir_kernel, stride=stride, th=th, H=H, W=W,
                          has_expand=has_expand, use_res=use_res),
        out_shape=jax.ShapeDtypeStruct((N, Ho, Wo, Cout), jnp.bfloat16),
        grid=(N, Ho // th),
        in_specs=in_specs,
        out_specs=pl.BlockSpec((1, th, Wo, Cout), lambda n, h: (n, h, 0, 0)),
        compiler_params=_compiler_params("parallel", "parallel"),
    )(*operands)


# ------------------------------ global avg pool -------------------------------

def _gap_kernel(x_ref, o_ref):
    o_ref[...] = jnp.mean(x_ref[...], axis=(1, 2))


def pallas_global_avg_pool(x):
    N, H, W, C = x.shape
    return pl.pallas_call(
        _gap_kernel,
        out_shape=jax.ShapeDtypeStruct((N, C), jnp.float32),
        grid=(N,),
        in_specs=[pl.BlockSpec((1, H, W, C), lambda n: (n, 0, 0, 0))],
        out_specs=pl.BlockSpec((1, C), lambda n: (n, 0)),
        compiler_params=_compiler_params("parallel"),
    )(x)


# --------------------------- MobileNetV2 structure ---------------------------

_MBV2_CFG = [
    # t, c, n, s  (torchvision MobileNetV2 inverted-residual setting)
    (1, 16, 1, 1),
    (6, 24, 2, 2),
    (6, 32, 3, 2),
    (6, 64, 4, 2),
    (6, 96, 3, 1),
    (6, 160, 3, 2),
    (6, 320, 1, 1),
]
LAST_CHANNEL = 1280   # self.net.last_channel == feature_dim


def init_glancer_params(key):
    cnt = [0]

    def nk():
        cnt[0] += 1
        return jax.random.fold_in(key, cnt[0])

    def lin(cin, cout):
        w = (jax.random.normal(nk(), (cin, cout), jnp.float32)
             / math.sqrt(cin)).astype(jnp.bfloat16)
        b = 0.01 * jax.random.normal(nk(), (1, cout), jnp.float32)
        return w, b

    def dwp(c):   # depthwise weights stay f32 (VPU math is f32 -> v5e-safe)
        w = jax.random.normal(nk(), (9, c), jnp.float32) / 3.0
        b = 0.01 * jax.random.normal(nk(), (1, c), jnp.float32)
        return w, b

    params = {}
    # stem: 3x3 / stride-2 / pad-1 conv -> 32 channels (im2col K = 3*3*3 = 27)
    params['stem_w'], params['stem_b'] = lin(27, 32)

    blocks = []
    in_c = 32
    for t, c, n, s in _MBV2_CFG:
        for i in range(n):
            stride = s if i == 0 else 1
            hidden = in_c * t
            blk = {'stride': stride, 'use_res': (stride == 1 and in_c == c)}
            if t != 1:
                blk['expand_w'], blk['expand_b'] = lin(in_c, hidden)
            else:
                blk['expand_w'], blk['expand_b'] = None, None
            blk['dw_w'], blk['dw_b'] = dwp(hidden)
            blk['proj_w'], blk['proj_b'] = lin(hidden, c)
            blocks.append(blk)
            in_c = c
    params['blocks'] = blocks
    # last ConvBNReLU: 1x1 conv 320 -> 1280
    params['last_w'], params['last_b'] = lin(in_c, LAST_CHANNEL)
    return params


def glancer_forward(params, x_nchw):
    """Glancer.forward(input) == self.net.get_featmap(input).

    Returns (featmap [N, 1280, H/32, W/32] in NCHW, pooled feature [N, 1280]).
    """
    x = jnp.transpose(x_nchw, (0, 2, 3, 1)).astype(jnp.bfloat16)   # NCHW -> NHWC
    N, H, W, _ = x.shape

    # stem conv 3x3 / s2 / p1: XLA im2col + M/Cout-tiled Pallas matmul (+ReLU6)
    Hout, Wout = H // 2, W // 2
    xpad = jnp.pad(x, ((0, 0), (1, 1), (1, 1), (0, 0)))
    cols = [xpad[:, dh:dh + 2 * Hout:2, dw:dw + 2 * Wout:2, :]
            for dh in range(3) for dw in range(3)]
    patches = jnp.concatenate(cols, axis=-1).reshape(N * Hout * Wout, 27)
    x = pallas_matmul(patches, params['stem_w'], params['stem_b'],
                      act=True).reshape(N, Hout, Wout, 32)

    # 17 inverted residual blocks, each a single fused pallas_call
    for blk in params['blocks']:
        x = fused_inverted_residual(x, blk)

    # last ConvBNReLU 320 -> 1280 (f32 output = the returned feature map)
    Nf, Hf, Wf, Cf = x.shape
    x = pallas_matmul(x.reshape(Nf * Hf * Wf, Cf), params['last_w'],
                      params['last_b'], act=True,
                      out_dtype=jnp.float32).reshape(Nf, Hf, Wf, LAST_CHANNEL)

    featmap = jnp.transpose(x, (0, 3, 1, 2))   # back to NCHW like PyTorch
    pooled = pallas_global_avg_pool(x)         # (N, 1280)
    # TODO(synk): Glancer.predict (Dropout + Linear classifier head) is not part
    # of forward() and is therefore not implemented here.
    return featmap, pooled


if __name__ == "__main__":
    key = jax.random.PRNGKey(0)
    params = init_glancer_params(jax.random.fold_in(key, 1))
    x = jax.random.normal(jax.random.fold_in(key, 2), (2, 3, 64, 64), jnp.float32)

    featmap, pooled = glancer_forward(params, x)
    jax.block_until_ready((featmap, pooled))

    assert featmap.shape == (2, LAST_CHANNEL, 2, 2)
    assert pooled.shape == (2, LAST_CHANNEL)
    assert featmap.dtype == jnp.float32 and pooled.dtype == jnp.float32

    print("KERNEL_OK")
</pallas_src>

<mosaic_0001>
module attributes {stable_mosaic.version = 11 : i64} {
  func.func @_mm_kernel(%arg0: i32, %arg1: i32, %arg2: memref<512x27xbf16, #tpu.memory_space<vmem>>, %arg3: memref<27x32xbf16, #tpu.memory_space<vmem>>, %arg4: memref<1x32xf32, #tpu.memory_space<vmem>>, %arg5: memref<512x32xbf16, #tpu.memory_space<vmem>>) attributes {dimension_semantics = [#tpu.dimension_semantics<parallel>, #tpu.dimension_semantics<parallel>], iteration_bounds = array<i64: 4, 1>, scalar_prefetch = 0 : i64, scratch_operands = 0 : i64, tpu.core_type = #tpu.core_type<tc>, window_params = [{transform_indices = @transform_0, window_bounds = array<i64: 512, 27>}, {transform_indices = @transform_1, window_bounds = array<i64: 27, 32>}, {transform_indices = @transform_2, window_bounds = array<i64: 1, 32>}, {transform_indices = @transform_3, window_bounds = array<i64: 512, 32>}]} {
    %c0 = arith.constant 0 : index
    %c0_0 = arith.constant 0 : index
    %0 = vector.load %arg2[%c0, %c0_0] : memref<512x27xbf16, #tpu.memory_space<vmem>>, vector<512x27xbf16>
    %c0_1 = arith.constant 0 : index
    %c0_2 = arith.constant 0 : index
    %1 = vector.load %arg3[%c0_1, %c0_2] : memref<27x32xbf16, #tpu.memory_space<vmem>>, vector<27x32xbf16>
    %cst = arith.constant dense<0.000000e+00> : vector<512x32xf32>
    %2 = tpu.matmul %0, %1, %cst {dimension_numbers = #tpu.dot_dimension_numbers<[1], [0], [0], [1], [0, 0, 1, 1], [], []>} : vector<512x27xbf16>, vector<27x32xbf16>, vector<512x32xf32> -> vector<512x32xf32>
    %c0_3 = arith.constant 0 : index
    %c0_4 = arith.constant 0 : index
    %3 = vector.load %arg4[%c0_3, %c0_4] : memref<1x32xf32, #tpu.memory_space<vmem>>, vector<1x32xf32>
    %4 = vector.broadcast %3 : vector<1x32xf32> to vector<512x32xf32>
    %5 = arith.addf %2, %4 : vector<512x32xf32>
    %cst_5 = arith.constant 0.000000e+00 : f32
    %6 = vector.broadcast %cst_5 : f32 to vector<512x32xf32>
    %7 = arith.maximumf %5, %6 : vector<512x32xf32>
    %cst_6 = arith.constant 6.000000e+00 : f32
    %8 = vector.broadcast %cst_6 : f32 to vector<512x32xf32>
    %9 = arith.minimumf %7, %8 : vector<512x32xf32>
    %10 = arith.truncf %9 : vector<512x32xf32> to vector<512x32xbf16>
    %c0_7 = arith.constant 0 : index
    %c0_8 = arith.constant 0 : index
    %11 = vector.load %arg5[%c0_7, %c0_8] : memref<512x32xbf16, #tpu.memory_space<vmem>>, vector<512x32xbf16>
    tpu.vector_store %arg5[%c0_7, %c0_8], %10 {strides = array<i32>} : memref<512x32xbf16, #tpu.memory_space<vmem>>, vector<512x32xbf16>,
    return
  }
  func.func @transform_0(%arg0: i32, %arg1: i32) -> (i32, i32) {
    %c0_i32 = arith.constant 0 : i32
    %c0_i32_0 = arith.constant 0 : i32
    return %arg0, %c0_i32 : i32, i32
  }
  func.func @transform_1(%arg0: i32, %arg1: i32) -> (i32, i32) {
    %c0_i32 = arith.constant 0 : i32
    %c0_i32_0 = arith.constant 0 : i32
    return %c0_i32, %arg1 : i32, i32
  }
  func.func @transform_2(%arg0: i32, %arg1: i32) -> (i32, i32) {
    %c0_i32 = arith.constant 0 : i32
    %c0_i32_0 = arith.constant 0 : i32
    return %c0_i32, %arg1 : i32, i32
  }
  func.func @transform_3(%arg0: i32, %arg1: i32) -> (i32, i32) {
    %c0_i32 = arith.constant 0 : i32
    return %arg0, %arg1 : i32, i32
  }
}

</mosaic_0001>

<llo_original>
// kernel: tpu_custom_call.1
$region0: #{tpu_custom_call.1}
  #allocation0 [shape = 'u32[]', space=smem, size = 0x4, offset = 0x4, fixed_abs, tag = 'smem constant byte address 0x4 - core index']
  #allocation1 [shape = 'u32[72,128]{1,0:T(1,128)}', space=vmem, size = 0x9000, scoped, tag = 'internal scratch']
  %s0 = inlined_call_operand.vmem [shape: bf16[2048,27], index: 0, kind: input, shape index: {}]
  %s1 = inlined_call_operand.vmem [shape: bf16[27,32], index: 1, kind: input, shape index: {}]
  %s2 = inlined_call_operand.vmem [shape: f32[1,32], index: 2, kind: input, shape index: {}]
  %s3 = inlined_call_operand.vmem [shape: bf16[2048,32], index: 3, kind: output, shape index: {}]
  %s4 = sld [smem:[#allocation0]]
  $region45: #{tpu_custom_call.1} parent=0
    _
  %s6 = ssub.s32 1, %s4
  %s7 = scalar_select 0, %s6, %s4
  loop: start=0, step=1, limit=6
  $region2: #{tpu_custom_call.1} parent=0 // loop_pre_header
    _
  $region3: #{tpu_custom_call.1} parent=0 // loop_header
    %s9 = sphi 0, %s13
    %p10 = scmp.ge.s32.totalorder %s9, 6
    %s16 = sphi 0, %s28
    %s17 = sphi 0, %s24
    %s18 = sphi 0, %s16
    %s19 = sphi 0, %s17
    %s20 = sphi 0, %s18
    %s21 = sphi 0, %s19
    %s31 = sphi 0, %s33
    %s34 = sphi 0, %s31
    %s35 = sphi 0, %s34
    %s51 = sphi 0, %s35
    %s57 = sphi 0, %s59
    %s60 = sphi 0, %s57
    %s61 = sphi 0, %s60
    %s77 = sphi 0, %s61
    %s83 = sphi 0, %s85
    %s86 = sphi 0, %s83
    %s87 = sphi 0, %s86
    %s103 = sphi 0, %s87
    %s111 = sphi 0, %s113
    %s114 = sphi 0, %s111
    %s115 = sphi 0, %s114
    %s131 = sphi 0, %s115
  $region4: #{tpu_custom_call.1} parent=0 // loop_header_branch
    %12 = sbr.rel (%p10) target = $region8
  $region5: #{tpu_custom_call.1} parent=0 // loop_body
    %s14 = ssub.s32 %s9, 1
    %s15 = ssub.s32 %s9, 2
    %s22 = sadd.s32 1, %s17
    %p23 = scmp.ge.s32.totalorder %s22, 1
    %s24 = scalar_select %p23, 0, %s22
    %s25 = sadd.s32 1, %s16
    %s26 = scalar_select %p23, %s25, %s16
    %p27 = scmp.ge.s32.totalorder %s26, 4
    %s28 = scalar_select %p27, 0, %s26
    %s29 = ssub.s32 %s16, %s28
    %p30 = scmp.eq.s32.totalorder %s29, 0
    %s32 = sadd.s32 %s31, 1
    %s33 = scalar_select %p30, %s31, %s32
    %p36 = pneg %p30
    %p37 = scmp.eq.s32.totalorder %s9, 3
    %p38 = por %p36, %p37
    %p39 = scmp.ne.s32.totalorder %s31, %s34
    %p40 = scmp.eq.s32.totalorder %s9, 0
    %p41 = por %p39, %p40
    %p42 = scmp.ne.s32.totalorder %s31, %s34
    %p43 = scmp.eq.s32.totalorder %s14, 3
    %p44 = por %p42, %p43
    %p45 = scmp.ne.s32.totalorder %s34, %s35
    %p46 = scmp.eq.s32.totalorder %s14, 0
    %p47 = por %p45, %p46
    %p48 = scmp.ne.s32.totalorder %s34, %s35
    %p49 = scmp.eq.s32.totalorder %s15, 3
    %p50 = por %p48, %p49
    %p52 = scmp.ne.s32.totalorder %s35, %s51
    %p53 = scmp.eq.s32.totalorder %s15, 0
    %p54 = por %p52, %p53
    %s55 = ssub.s32 %s17, %s24
    %p56 = scmp.eq.s32.totalorder %s55, 0
    %s58 = sadd.s32 %s57, 1
    %s59 = scalar_select %p56, %s57, %s58
    %p62 = pneg %p56
    %p63 = scmp.eq.s32.totalorder %s9, 3
    %p64 = por %p62, %p63
    %p65 = scmp.ne.s32.totalorder %s57, %s60
    %p66 = scmp.eq.s32.totalorder %s9, 0
    %p67 = por %p65, %p66
    %p68 = scmp.ne.s32.totalorder %s57, %s60
    %p69 = scmp.eq.s32.totalorder %s14, 3
    %p70 = por %p68, %p69
    %p71 = scmp.ne.s32.totalorder %s60, %s61
    %p72 = scmp.eq.s32.totalorder %s14, 0
    %p73 = por %p71, %p72
    %p74 = scmp.ne.s32.totalorder %s60, %s61
    %p75 = scmp.eq.s32.totalorder %s15, 3
    %p76 = por %p74, %p75
    %p78 = scmp.ne.s32.totalorder %s61, %s77
    %p79 = scmp.eq.s32.totalorder %s15, 0
    %p80 = por %p78, %p79
    %s81 = ssub.s32 %s17, %s24
    %p82 = scmp.eq.s32.totalorder %s81, 0
    %s84 = sadd.s32 %s83, 1
    %s85 = scalar_select %p82, %s83, %s84
    %p88 = pneg %p82
    %p89 = scmp.eq.s32.totalorder %s9, 3
    %p90 = por %p88, %p89
    %p91 = scmp.ne.s32.totalorder %s83, %s86
    %p92 = scmp.eq.s32.totalorder %s9, 0
    %p93 = por %p91, %p92
    %p94 = scmp.ne.s32.totalorder %s83, %s86
    %p95 = scmp.eq.s32.totalorder %s14, 3
    %p96 = por %p94, %p95
    %p97 = scmp.ne.s32.totalorder %s86, %s87
    %p98 = scmp.eq.s32.totalorder %s14, 0
    %p99 = por %p97, %p98
    %p100 = scmp.ne.s32.totalorder %s86, %s87
    %p101 = scmp.eq.s32.totalorder %s15, 3
    %p102 = por %p100, %p101
    %p104 = scmp.ne.s32.totalorder %s87, %s103
    %p105 = scmp.eq.s32.totalorder %s15, 0
    %p106 = por %p104, %p105
    %s107 = ssub.s32 %s16, %s28
    %s108 = ssub.s32 %s17, %s24
    %s109 = sor.u32 %s107, %s108
    %p110 = scmp.eq.s32.totalorder %s109, 0
    %s112 = sadd.s32 %s111, 1
    %s113 = scalar_select %p110, %s111, %s112
    %p116 = pneg %p110
    %p117 = scmp.eq.s32.totalorder %s9, 3
    %p118 = por %p116, %p117
    %p119 = scmp.ne.s32.totalorder %s111, %s114
    %p120 = scmp.eq.s32.totalorder %s9, 0
    %p121 = por %p119, %p120
    %p122 = scmp.ne.s32.totalorder %s111, %s114
    %p123 = scmp.eq.s32.totalorder %s14, 3
    %p124 = por %p122, %p123
    %p125 = scmp.ne.s32.totalorder %s114, %s115
    %p126 = scmp.eq.s32.totalorder %s14, 0
    %p127 = por %p125, %p126
    %p128 = scmp.ne.s32.totalorder %s114, %s115
    %p129 = scmp.eq.s32.totalorder %s15, 3
    %p130 = por %p128, %p129
    %p132 = scmp.ne.s32.totalorder %s115, %s131
    %p133 = scmp.eq.s32.totalorder %s15, 0
    %p134 = por %p132, %p133
    %p135 = scmp.le.s32.totalorder 1, %s9
    %p136 = scmp.lt.s32.totalorder %s9, 5
    %p137 = pnand %p135, %p136
    %p138 = pneg %p137
    // Predicated region
    $region9: #{tpu_custom_call.1} parent=5 // pred_check
      _
    $region10: #{tpu_custom_call.1} parent=5 // pred_check_branch
      %140 = sbr.rel (%p137) target = $region12
    $region11: #{tpu_custom_call.1} parent=5 // pred_region
      %s141 = ssub.s32 %s9, 1
      // Predicated region
      $region13: #{tpu_custom_call.1} parent=11 // pred_check
        %p142 = pneg %p73
      $region14: #{tpu_custom_call.1} parent=11 // pred_check_branch
        %144 = sbr.rel (%p142) target = $region16
      $region15: #{tpu_custom_call.1} parent=11 // pred_region
        %p145 = scmp.lt.s32.totalorder %s19, 0
        %s146 = scalar_select %p145, %s19, 0
        %s147 = smul.addr %s146, 4
        %s148 = scalar_lea.vmem %s1, %s147
      $region16: #{tpu_custom_call.1} parent=11 // pred_fallthru
        _
      // Predicated region
      $region17: #{tpu_custom_call.1} parent=11 // pred_check
        %p149 = pneg %p99
      $region18: #{tpu_custom_call.1} parent=11 // pred_check_branch
        %151 = sbr.rel (%p149) target = $region20
      $region19: #{tpu_custom_call.1} parent=11 // pred_region
        %p152 = scmp.lt.s32.totalorder %s19, 0
        %s153 = scalar_select %p152, %s19, 0
        %s154 = scalar_lea.vmem %s2, %s153
      $region20: #{tpu_custom_call.1} parent=11 // pred_fallthru
        _
    $region12: #{tpu_custom_call.1} parent=5 // pred_fallthru
      _
    %p155 = scmp.lt.s32.totalorder %s9, 4
    // Predicated region
    $region21: #{tpu_custom_call.1} parent=5 // pred_check
      %p156 = pneg %p155
    $region22: #{tpu_custom_call.1} parent=5 // pred_check_branch
      %158 = sbr.rel (%p156) target = $region24
    $region23: #{tpu_custom_call.1} parent=5 // pred_region
      // Predicated region
      $region25: #{tpu_custom_call.1} parent=23 // pred_check
        %p159 = pneg %p41
      $region26: #{tpu_custom_call.1} parent=23 // pred_check_branch
        %161 = sbr.rel (%p159) target = $region28
      $region27: #{tpu_custom_call.1} parent=23 // pred_region
        %s162 = smul.u32 64, %s16
        %p163 = scmp.lt.s32.totalorder %s162, 255
        %s164 = scalar_select %p163, %s162, 255
        %s165 = smul.addr %s164, 4
        %s166 = scalar_lea.vmem %s0, %s165
        %s167 = smul.u32 64, %s16
      $region28: #{tpu_custom_call.1} parent=23 // pred_fallthru
        _
    $region24: #{tpu_custom_call.1} parent=5 // pred_fallthru
      _
    %p168 = scmp.le.s32.totalorder 1, %s9
    %p169 = scmp.lt.s32.totalorder %s9, 5
    %p170 = pnand %p168, %p169
    %p171 = pneg %p170
    // Predicated region
    $region29: #{tpu_custom_call.1} parent=5 // pred_check
      _
    $region30: #{tpu_custom_call.1} parent=5 // pred_check_branch
      %173 = sbr.rel (%p170) target = $region32
    $region31: #{tpu_custom_call.1} parent=5 // pred_region
      %s174 = ssub.s32 %s9, 1
      %s175 = smul.u32 64, %s18
      %p176 = scmp.lt.s32.totalorder %s175, 255
      %s177 = scalar_select %p176, %s175, 255
      %s178 = smul.addr %s177, 4
      %s179 = scalar_lea.vmem %s0, %s178
      %p180 = pneg %p47
      %p181 = pneg %p44
      %p182 = scmp.lt.s32.totalorder %s19, 0
      %s183 = scalar_select %p182, %s19, 0
      %s184 = smul.addr %s183, 4
      %s185 = scalar_lea.vmem %s1, %s184
      %p186 = pneg %p73
      %p187 = pneg %p70
      %p188 = scmp.lt.s32.totalorder %s19, 0
      %s189 = scalar_select %p188, %s19, 0
      %s190 = scalar_lea.vmem %s2, %s189
      %p191 = pneg %p99
      %p192 = pneg %p96
      %p193 = pneg %p127
      %p194 = pneg %p124
      %s195 = smul.u32 64, %s18
      %p196 = scmp.lt.s32.totalorder %s195, 255
      %s197 = scalar_select %p196, %s195, 255
      %p198 = scmp.lt.s32.totalorder %s19, 0
      %s199 = scalar_select %p198, %s19, 0
      %s200 = sadd.s32 %s199, %s197
      %s201 = smul.addr %s200, 4
      %s202 = scalar_lea.vmem %s3, %s201
      %s203 = smul.u32 64, %s18
      %p204 = scmp.lt.s32.totalorder %s203, 255
      %s205 = scalar_select %p204, %s203, 255
      %s206 = smul.addr %s205, 4
      %s207 = scalar_lea.vmem %s0, %s206
      %s208 = smul.u32 64, %s18
      %p209 = scmp.lt.s32.totalorder %s19, 0
      %s210 = scalar_select %p209, %s19, 0
      %s211 = smul.addr %s210, 4
      %s212 = scalar_lea.vmem %s1, %s211
      %p213 = scmp.lt.s32.totalorder %s19, 0
      %s214 = scalar_select %p213, %s19, 0
      %s215 = scalar_lea.vmem %s2, %s214
      %s216 = smul.u32 64, %s18
      %p217 = scmp.lt.s32.totalorder %s216, 255
      %s218 = scalar_select %p217, %s216, 255
      %p219 = scmp.lt.s32.totalorder %s19, 0
      %s220 = scalar_select %p219, %s19, 0
      %s221 = sadd.s32 %s220, %s218
      %s222 = smul.addr %s221, 4
      %s223 = scalar_lea.vmem %s3, %s222
      %s224 = smul.u32 64, %s18
      %v226 = vld [vmem:[%s207] sm:$0xf]
      %v227 = vld [vmem:[%s207 + $0x4] sm:$0xf]
      %v228 = vld [vmem:[%s207 + $0x8] sm:$0xf]
      %v229 = vld [vmem:[%s207 + $0xc] sm:$0xf]
      %v230 = vld [vmem:[%s207 + $0x10] sm:$0xf]
      %v231 = vld [vmem:[%s207 + $0x14] sm:$0xf]
      %v232 = vld [vmem:[%s207 + $0x18] sm:$0xf]
      %v233 = vld [vmem:[%s207 + $0x1c] sm:$0xf]
      %v234 = vld [vmem:[%s207 + $0x20] sm:$0xf]
      %v235 = vld [vmem:[%s207 + $0x24] sm:$0xf]
      %v236 = vld [vmem:[%s207 + $0x28] sm:$0xf]
      %v237 = vld [vmem:[%s207 + $0x2c] sm:$0xf]
      %v238 = vld [vmem:[%s207 + $0x30] sm:$0xf]
      %v239 = vld [vmem:[%s207 + $0x34] sm:$0xf]
      %v240 = vld [vmem:[%s207 + $0x38] sm:$0xf]
      %v241 = vld [vmem:[%s207 + $0x3c] sm:$0xf]
      %v242 = vld [vmem:[%s207 + $0x40] sm:$0xf]
      %v243 = vld [vmem:[%s207 + $0x44] sm:$0xf]
      %v244 = vld [vmem:[%s207 + $0x48] sm:$0xf]
      %v245 = vld [vmem:[%s207 + $0x4c] sm:$0xf]
      %v246 = vld [vmem:[%s207 + $0x50] sm:$0xf]
      %v247 = vld [vmem:[%s207 + $0x54] sm:$0xf]
      %v248 = vld [vmem:[%s207 + $0x58] sm:$0xf]
      %v249 = vld [vmem:[%s207 + $0x5c] sm:$0xf]
      %v250 = vld [vmem:[%s207 + $0x60] sm:$0xf]
      %v251 = vld [vmem:[%s207 + $0x64] sm:$0xf]
      %v252 = vld [vmem:[%s207 + $0x68] sm:$0xf]
      %v253 = vld [vmem:[%s207 + $0x6c] sm:$0xf]
      %v254 = vld [vmem:[%s207 + $0x70] sm:$0xf]
      %v255 = vld [vmem:[%s207 + $0x74] sm:$0xf]
      %v256 = vld [vmem:[%s207 + $0x78] sm:$0xf]
      %v257 = vld [vmem:[%s207 + $0x7c] sm:$0xf]
      %v258 = vld [vmem:[%s207 + $0x80] sm:$0xf]
      %v259 = vld [vmem:[%s207 + $0x84] sm:$0xf]
      %v260 = vld [vmem:[%s207 + $0x88] sm:$0xf]
      %v261 = vld [vmem:[%s207 + $0x8c] sm:$0xf]
      %v262 = vld [vmem:[%s207 + $0x90] sm:$0xf]
      %v263 = vld [vmem:[%s207 + $0x94] sm:$0xf]
      %v264 = vld [vmem:[%s207 + $0x98] sm:$0xf]
      %v265 = vld [vmem:[%s207 + $0x9c] sm:$0xf]
      %v266 = vld [vmem:[%s207 + $0xa0] sm:$0xf]
      %v267 = vld [vmem:[%s207 + $0xa4] sm:$0xf]
      %v268 = vld [vmem:[%s207 + $0xa8] sm:$0xf]
      %v269 = vld [vmem:[%s207 + $0xac] sm:$0xf]
      %v270 = vld [vmem:[%s207 + $0xb0] sm:$0xf]
      %v271 = vld [vmem:[%s207 + $0xb4] sm:$0xf]
      %v272 = vld [vmem:[%s207 + $0xb8] sm:$0xf]
      %v273 = vld [vmem:[%s207 + $0xbc] sm:$0xf]
      %v274 = vld [vmem:[%s207 + $0xc0] sm:$0xf]
      %v275 = vld [vmem:[%s207 + $0xc4] sm:$0xf]
      %v276 = vld [vmem:[%s207 + $0xc8] sm:$0xf]
      %v277 = vld [vmem:[%s207 + $0xcc] sm:$0xf]
      %v278 = vld [vmem:[%s207 + $0xd0] sm:$0xf]
      %v279 = vld [vmem:[%s207 + $0xd4] sm:$0xf]
      %v280 = vld [vmem:[%s207 + $0xd8] sm:$0xf]
      %v281 = vld [vmem:[%s207 + $0xdc] sm:$0xf]
      %v282 = vld [vmem:[%s207 + $0xe0] sm:$0xf]
      %v283 = vld [vmem:[%s207 + $0xe4] sm:$0xf]
      %v284 = vld [vmem:[%s207 + $0xe8] sm:$0xf]
      %v285 = vld [vmem:[%s207 + $0xec] sm:$0xf]
      %v286 = vld [vmem:[%s207 + $0xf0] sm:$0xf]
      %v287 = vld [vmem:[%s207 + $0xf4] sm:$0xf]
      %v288 = vld [vmem:[%s207 + $0xf8] sm:$0xf]
      %v289 = vld [vmem:[%s207 + $0xfc] sm:$0xf]
      %v290 = vld [vmem:[%s212] sm:$0xf]
      %v291 = vld [vmem:[%s212 + $0x4] sm:$0xf]
      %v292 = vld [vmem:[%s212 + $0x8] sm:$0xf]
      %v293 = vld [vmem:[%s212 + $0xc] sm:$0x3]
      %v294 = vld [vmem:[%s215] sm:$0x1]
      %v296 = vperm.slane %v294, 0
      %v362 = vunpack.c.l.b16 %v226
      %v363 = vunpack.c.l.b16 %v227
      %v364 = vunpack.c.l.b16 %v228
      %v365 = vunpack.c.l.b16 %v229
      %v366 = vunpack.c.l.b16 %v230
      %v367 = vunpack.c.l.b16 %v231
      %v368 = vunpack.c.l.b16 %v232
      %v369 = vunpack.c.l.b16 %v233
      %v370 = vunpack.c.l.b16 %v234
      %v371 = vunpack.c.l.b16 %v235
      %v372 = vunpack.c.l.b16 %v236
      %v373 = vunpack.c.l.b16 %v237
      %v374 = vunpack.c.l.b16 %v238
      %v375 = vunpack.c.l.b16 %v239
      %v376 = vunpack.c.l.b16 %v240
      %v377 = vunpack.c.l.b16 %v241
      %v378 = vunpack.c.l.b16 %v242
      %v379 = vunpack.c.l.b16 %v243
      %v380 = vunpack.c.l.b16 %v244
      %v381 = vunpack.c.l.b16 %v245
      %v382 = vunpack.c.l.b16 %v246
      %v383 = vunpack.c.l.b16 %v247
      %v384 = vunpack.c.l.b16 %v248
      %v385 = vunpack.c.l.b16 %v249
      %v386 = vunpack.c.l.b16 %v250
      %v387 = vunpack.c.l.b16 %v251
      %v388 = vunpack.c.l.b16 %v252
      %v389 = vunpack.c.l.b16 %v253
      %v390 = vunpack.c.l.b16 %v254
      %v391 = vunpack.c.l.b16 %v255
      %v392 = vunpack.c.l.b16 %v256
      %v393 = vunpack.c.l.b16 %v257
      %v394 = vunpack.c.l.b16 %v258
      %v395 = vunpack.c.l.b16 %v259
      %v396 = vunpack.c.l.b16 %v260
      %v397 = vunpack.c.l.b16 %v261
      %v398 = vunpack.c.l.b16 %v262
      %v399 = vunpack.c.l.b16 %v263
      %v400 = vunpack.c.l.b16 %v264
      %v401 = vunpack.c.l.b16 %v265
      %v402 = vunpack.c.l.b16 %v266
      %v403 = vunpack.c.l.b16 %v267
      %v404 = vunpack.c.l.b16 %v268
      %v405 = vunpack.c.l.b16 %v269
      %v406 = vunpack.c.l.b16 %v270
      %v407 = vunpack.c.l.b16 %v271
      %v408 = vunpack.c.l.b16 %v272
      %v409 = vunpack.c.l.b16 %v273
      %v410 = vunpack.c.l.b16 %v274
      %v411 = vunpack.c.l.b16 %v275
      %v412 = vunpack.c.l.b16 %v276
      %v413 = vunpack.c.l.b16 %v277
      %v414 = vunpack.c.l.b16 %v278
      %v415 = vunpack.c.l.b16 %v279
      %v416 = vunpack.c.l.b16 %v280
      %v417 = vunpack.c.l.b16 %v281
      %v418 = vunpack.c.l.b16 %v282
      %v419 = vunpack.c.l.b16 %v283
      %v420 = vunpack.c.l.b16 %v284
      %v421 = vunpack.c.l.b16 %v285
      %v422 = vunpack.c.l.b16 %v286
      %v423 = vunpack.c.l.b16 %v287
      %v424 = vunpack.c.l.b16 %v288
      %v425 = vunpack.c.l.b16 %v289
      %v426 = vpack.c.b16 %v363, %v362
      %v427 = vpack.c.b16 %v365, %v364
      %v428 = vpack.c.b16 %v367, %v366
      %v429 = vpack.c.b16 %v369, %v368
      %v430 = vpack.c.b16 %v371, %v370
      %v431 = vpack.c.b16 %v373, %v372
      %v432 = vpack.c.b16 %v375, %v374
      %v433 = vpack.c.b16 %v377, %v376
      %v434 = vpack.c.b16 %v379, %v378
      %v435 = vpack.c.b16 %v381, %v380
      %v436 = vpack.c.b16 %v383, %v382
      %v437 = vpack.c.b16 %v385, %v384
      %v438 = vpack.c.b16 %v387, %v386
      %v439 = vpack.c.b16 %v389, %v388
      %v440 = vpack.c.b16 %v391, %v390
      %v441 = vpack.c.b16 %v393, %v392
      %v442 = vpack.c.b16 %v395, %v394
      %v443 = vpack.c.b16 %v397, %v396
      %v444 = vpack.c.b16 %v399, %v398
      %v445 = vpack.c.b16 %v401, %v400
      %v446 = vpack.c.b16 %v403, %v402
      %v447 = vpack.c.b16 %v405, %v404
      %v448 = vpack.c.b16 %v407, %v406
      %v449 = vpack.c.b16 %v409, %v408
      %v450 = vpack.c.b16 %v411, %v410
      %v451 = vpack.c.b16 %v413, %v412
      %v452 = vpack.c.b16 %v415, %v414
      %v453 = vpack.c.b16 %v417, %v416
      %v454 = vpack.c.b16 %v419, %v418
      %v455 = vpack.c.b16 %v421, %v420
      %v456 = vpack.c.b16 %v423, %v422
      %v457 = vpack.c.b16 %v425, %v424
      %v462 = vunpack.c.l.b16 %v290
      %v463 = vunpack.c.l.b16 %v291
      %v464 = vunpack.c.l.b16 %v292
      %v465 = vunpack.c.l.b16 %v293
      %v466 = vpack.c.b16 %v463, %v462
      %v467 = vpack.c.b16 %v465, %v464
      %vm469 = vcmask 220160
      %v471 = vsel %vm469, %v426, 0
      %v474 = vsel %vm469, %v427, 0
      %v477 = vsel %vm469, %v428, 0
      %v480 = vsel %vm469, %v429, 0
      %v483 = vsel %vm469, %v430, 0
      %v486 = vsel %vm469, %v431, 0
      %v489 = vsel %vm469, %v432, 0
      %v492 = vsel %vm469, %v433, 0
      %v495 = vsel %vm469, %v434, 0
      %v498 = vsel %vm469, %v435, 0
      %v501 = vsel %vm469, %v436, 0
      %v504 = vsel %vm469, %v437, 0
      %v507 = vsel %vm469, %v438, 0
      %v510 = vsel %vm469, %v439, 0
      %v513 = vsel %vm469, %v440, 0
      %v516 = vsel %vm469, %v441, 0
      %v519 = vsel %vm469, %v442, 0
      %v522 = vsel %vm469, %v443, 0
      %v525 = vsel %vm469, %v444, 0
      %v528 = vsel %vm469, %v445, 0
      %v531 = vsel %vm469, %v446, 0
      %v534 = vsel %vm469, %v447, 0
      %v537 = vsel %vm469, %v448, 0
      %v540 = vsel %vm469, %v449, 0
      %v543 = vsel %vm469, %v450, 0
      %v546 = vsel %vm469, %v451, 0
      %v549 = vsel %vm469, %v452, 0
      %v552 = vsel %vm469, %v453, 0
      %v555 = vsel %vm469, %v454, 0
      %v558 = vsel %vm469, %v455, 0
      %v561 = vsel %vm469, %v456, 0
      %v564 = vsel %vm469, %v457, 0
      %vm566 = vcmask 1044480
      %vm567 = vcmask 1045504
      %v568 = vsel %vm566, 4294967295, 65535
      %v569 = vsel %vm567, %v568, 0
      %v571 = vand.u32 %v467, %v569
      %573 = vmatpush.bf16.msra.mxu0 0
      %574 = vmatpush.bf16.msra.mxu0 0
      %575 = vmatpush.bf16.msra.mxu0 0
      %576 = vmatpush.bf16.msra.mxu0 0
      %577 = vmatpush.bf16.msra.mxu0 0
      %578 = vmatpush.bf16.msra.mxu0 0
      %579 = vmatpush.bf16.msra.mxu0 %v571
      %580 = vmatpush.bf16.msra.mxu0 %v466
      %581 = vmatmul.bf16.gmra.mxu0 %v471
      %v582 = vpop.f32.mrf.mxu0
      %v583 = vadd.f32 %v296, %v582
      %v584 = vpop.f32.mrf.mxu0
      %v585 = vadd.f32 %v296, %v584
      %586 = vmatmul.bf16.gmra.mxu0 %v474
      %v587 = vpop.f32.mrf.mxu0
      %v588 = vadd.f32 %v296, %v587
      %v589 = vpop.f32.mrf.mxu0
      %v590 = vadd.f32 %v296, %v589
      %591 = vmatmul.bf16.gmra.mxu0 %v477
      %v592 = vpop.f32.mrf.mxu0
      %v593 = vadd.f32 %v296, %v592
      %v594 = vpop.f32.mrf.mxu0
      %v595 = vadd.f32 %v296, %v594
      %596 = vmatmul.bf16.gmra.mxu0 %v480
      %v597 = vpop.f32.mrf.mxu0
      %v598 = vadd.f32 %v296, %v597
      %v599 = vpop.f32.mrf.mxu0
      %v600 = vadd.f32 %v296, %v599
      %601 = vmatmul.bf16.gmra.mxu0 %v483
      %v602 = vpop.f32.mrf.mxu0
      %v603 = vadd.f32 %v296, %v602
      %v604 = vpop.f32.mrf.mxu0
      %v605 = vadd.f32 %v296, %v604
      %606 = vmatmul.bf16.gmra.mxu0 %v486
      %v607 = vpop.f32.mrf.mxu0
      %v608 = vadd.f32 %v296, %v607
      %v609 = vpop.f32.mrf.mxu0
      %v610 = vadd.f32 %v296, %v609
      %611 = vmatmul.bf16.gmra.mxu0 %v489
      %v612 = vpop.f32.mrf.mxu0
      %v613 = vadd.f32 %v296, %v612
      %v614 = vpop.f32.mrf.mxu0
      %v615 = vadd.f32 %v296, %v614
      %616 = vmatmul.bf16.gmra.mxu0 %v492
      %v617 = vpop.f32.mrf.mxu0
      %v618 = vadd.f32 %v296, %v617
      %v619 = vpop.f32.mrf.mxu0
      %v620 = vadd.f32 %v296, %v619
      %621 = vmatmul.bf16.gmra.mxu0 %v495
      %v622 = vpop.f32.mrf.mxu0
      %v623 = vadd.f32 %v296, %v622
      %v624 = vpop.f32.mrf.mxu0
      %v625 = vadd.f32 %v296, %v624
      %626 = vmatmul.bf16.gmra.mxu0 %v498
      %v627 = vpop.f32.mrf.mxu0
      %v628 = vadd.f32 %v296, %v627
      %v629 = vpop.f32.mrf.mxu0
      %v630 = vadd.f32 %v296, %v629
      %631 = vmatmul.bf16.gmra.mxu0 %v501
      %v632 = vpop.f32.mrf.mxu0
      %v633 = vadd.f32 %v296, %v632
      %v634 = vpop.f32.mrf.mxu0
      %v635 = vadd.f32 %v296, %v634
      %636 = vmatmul.bf16.gmra.mxu0 %v504
      %v637 = vpop.f32.mrf.mxu0
      %v638 = vadd.f32 %v296, %v637
      %v639 = vpop.f32.mrf.mxu0
      %v640 = vadd.f32 %v296, %v639
      %641 = vmatmul.bf16.gmra.mxu0 %v507
      %v642 = vpop.f32.mrf.mxu0
      %v643 = vadd.f32 %v296, %v642
      %v644 = vpop.f32.mrf.mxu0
      %v645 = vadd.f32 %v296, %v644
      %646 = vmatmul.bf16.gmra.mxu0 %v510
      %v647 = vpop.f32.mrf.mxu0
      %v648 = vadd.f32 %v296, %v647
      %v649 = vpop.f32.mrf.mxu0
      %v650 = vadd.f32 %v296, %v649
      %651 = vmatmul.bf16.gmra.mxu0 %v513
      %v652 = vpop.f32.mrf.mxu0
      %v653 = vadd.f32 %v296, %v652
      %v654 = vpop.f32.mrf.mxu0
      %v655 = vadd.f32 %v296, %v654
      %656 = vmatmul.bf16.gmra.mxu0 %v516
      %v657 = vpop.f32.mrf.mxu0
      %v658 = vadd.f32 %v296, %v657
      %v659 = vpop.f32.mrf.mxu0
      %v660 = vadd.f32 %v296, %v659
      %661 = vmatmul.bf16.gmra.mxu0 %v519
      %v662 = vpop.f32.mrf.mxu0
      %v663 = vadd.f32 %v296, %v662
      %v664 = vpop.f32.mrf.mxu0
      %v665 = vadd.f32 %v296, %v664
      %666 = vmatmul.bf16.gmra.mxu0 %v522
      %v667 = vpop.f32.mrf.mxu0
      %v668 = vadd.f32 %v296, %v667
      %v669 = vpop.f32.mrf.mxu0
      %v670 = vadd.f32 %v296, %v669
      %671 = vmatmul.bf16.gmra.mxu0 %v525
      %v672 = vpop.f32.mrf.mxu0
      %v673 = vadd.f32 %v296, %v672
      %v674 = vpop.f32.mrf.mxu0
      %v675 = vadd.f32 %v296, %v674
      %676 = vmatmul.bf16.gmra.mxu0 %v528
      %v677 = vpop.f32.mrf.mxu0
      %v678 = vadd.f32 %v296, %v677
      %v679 = vpop.f32.mrf.mxu0
      %v680 = vadd.f32 %v296, %v679
      %681 = vmatmul.bf16.gmra.mxu0 %v531
      %v682 = vpop.f32.mrf.mxu0
      %v683 = vadd.f32 %v296, %v682
      %v684 = vpop.f32.mrf.mxu0
      %v685 = vadd.f32 %v296, %v684
      %686 = vmatmul.bf16.gmra.mxu0 %v534
      %v687 = vpop.f32.mrf.mxu0
      %v688 = vadd.f32 %v296, %v687
      %v689 = vpop.f32.mrf.mxu0
      %v690 = vadd.f32 %v296, %v689
      %691 = vmatmul.bf16.gmra.mxu0 %v537
      %v692 = vpop.f32.mrf.mxu0
      %v693 = vadd.f32 %v296, %v692
      %v694 = vpop.f32.mrf.mxu0
      %v695 = vadd.f32 %v296, %v694
      %696 = vmatmul.bf16.gmra.mxu0 %v540
      %v697 = vpop.f32.mrf.mxu0
      %v698 = vadd.f32 %v296, %v697
      %v699 = vpop.f32.mrf.mxu0
      %v700 = vadd.f32 %v296, %v699
      %701 = vmatmul.bf16.gmra.mxu0 %v543
      %v702 = vpop.f32.mrf.mxu0
      %v703 = vadd.f32 %v296, %v702
      %v704 = vpop.f32.mrf.mxu0
      %v705 = vadd.f32 %v296, %v704
      %706 = vmatmul.bf16.gmra.mxu0 %v546
      %v707 = vpop.f32.mrf.mxu0
      %v708 = vadd.f32 %v296, %v707
      %v709 = vpop.f32.mrf.mxu0
      %v710 = vadd.f32 %v296, %v709
      %711 = vmatmul.bf16.gmra.mxu0 %v549
      %v712 = vpop.f32.mrf.mxu0
      %v713 = vadd.f32 %v296, %v712
      %v714 = vpop.f32.mrf.mxu0
      %v715 = vadd.f32 %v296, %v714
      %716 = vmatmul.bf16.gmra.mxu0 %v552
      %v717 = vpop.f32.mrf.mxu0
      %v718 = vadd.f32 %v296, %v717
      %v719 = vpop.f32.mrf.mxu0
      %v720 = vadd.f32 %v296, %v719
      %721 = vmatmul.bf16.gmra.mxu0 %v555
      %v722 = vpop.f32.mrf.mxu0
      %v723 = vadd.f32 %v296, %v722
      %v724 = vpop.f32.mrf.mxu0
      %v725 = vadd.f32 %v296, %v724
      %726 = vmatmul.bf16.gmra.mxu0 %v558
      %v727 = vpop.f32.mrf.mxu0
      %v728 = vadd.f32 %v296, %v727
      %v729 = vpop.f32.mrf.mxu0
      %v730 = vadd.f32 %v296, %v729
      %731 = vmatmul.bf16.gmra.mxu0 %v561
      %v732 = vpop.f32.mrf.mxu0
      %v733 = vadd.f32 %v296, %v732
      %v734 = vpop.f32.mrf.mxu0
      %v735 = vadd.f32 %v296, %v734
      %736 = vmatmul.bf16.gmra.mxu0 %v564
      %v737 = vpop.f32.mrf.mxu0
      %v738 = vadd.f32 %v296, %v737
      %v739 = vpop.f32.mrf.mxu0
      %v740 = vadd.f32 %v296, %v739
      %741 = vdwg.mxu0
      %v742 = vmax.f32 %v583, 0.0
      %v743 = vmax.f32 %v585, 0.0
      %v744 = vmax.f32 %v588, 0.0
      %v745 = vmax.f32 %v590, 0.0
      %v746 = vmax.f32 %v593, 0.0
      %v747 = vmax.f32 %v595, 0.0
      %v748 = vmax.f32 %v598, 0.0
      %v749 = vmax.f32 %v600, 0.0
      %v750 = vmax.f32 %v603, 0.0
      %v751 = vmax.f32 %v605, 0.0
      %v752 = vmax.f32 %v608, 0.0
      %v753 = vmax.f32 %v610, 0.0
      %v754 = vmax.f32 %v613, 0.0
      %v755 = vmax.f32 %v615, 0.0
      %v756 = vmax.f32 %v618, 0.0
      %v757 = vmax.f32 %v620, 0.0
      %v758 = vmax.f32 %v623, 0.0
      %v759 = vmax.f32 %v625, 0.0
      %v760 = vmax.f32 %v628, 0.0
      %v761 = vmax.f32 %v630, 0.0
      %v762 = vmax.f32 %v633, 0.0
      %v763 = vmax.f32 %v635, 0.0
      %v764 = vmax.f32 %v638, 0.0
      %v765 = vmax.f32 %v640, 0.0
      %v766 = vmax.f32 %v643, 0.0
      %v767 = vmax.f32 %v645, 0.0
      %v768 = vmax.f32 %v648, 0.0
      %v769 = vmax.f32 %v650, 0.0
      %v770 = vmax.f32 %v653, 0.0
      %v771 = vmax.f32 %v655, 0.0
      %v772 = vmax.f32 %v658, 0.0
      %v773 = vmax.f32 %v660, 0.0
      %v774 = vmax.f32 %v663, 0.0
      %v775 = vmax.f32 %v665, 0.0
      %v776 = vmax.f32 %v668, 0.0
      %v777 = vmax.f32 %v670, 0.0
      %v778 = vmax.f32 %v673, 0.0
      %v779 = vmax.f32 %v675, 0.0
      %v780 = vmax.f32 %v678, 0.0
      %v781 = vmax.f32 %v680, 0.0
      %v782 = vmax.f32 %v683, 0.0
      %v783 = vmax.f32 %v685, 0.0
      %v784 = vmax.f32 %v688, 0.0
      %v785 = vmax.f32 %v690, 0.0
      %v786 = vmax.f32 %v693, 0.0
      %v787 = vmax.f32 %v695, 0.0
      %v788 = vmax.f32 %v698, 0.0
      %v789 = vmax.f32 %v700, 0.0
      %v790 = vmax.f32 %v703, 0.0
      %v791 = vmax.f32 %v705, 0.0
      %v792 = vmax.f32 %v708, 0.0
      %v793 = vmax.f32 %v710, 0.0
      %v794 = vmax.f32 %v713, 0.0
      %v795 = vmax.f32 %v715, 0.0
      %v796 = vmax.f32 %v718, 0.0
      %v797 = vmax.f32 %v720, 0.0
      %v798 = vmax.f32 %v723, 0.0
      %v799 = vmax.f32 %v725, 0.0
      %v800 = vmax.f32 %v728, 0.0
      %v801 = vmax.f32 %v730, 0.0
      %v802 = vmax.f32 %v733, 0.0
      %v803 = vmax.f32 %v735, 0.0
      %v804 = vmax.f32 %v738, 0.0
      %v805 = vmax.f32 %v740, 0.0
      %v806 = vmin.f32 %v742, 6.0
      %v807 = vmin.f32 %v743, 6.0
      %v808 = vmin.f32 %v744, 6.0
      %v809 = vmin.f32 %v745, 6.0
      %v810 = vmin.f32 %v746, 6.0
      %v811 = vmin.f32 %v747, 6.0
      %v812 = vmin.f32 %v748, 6.0
      %v813 = vmin.f32 %v749, 6.0
      %v814 = vmin.f32 %v750, 6.0
      %v815 = vmin.f32 %v751, 6.0
      %v816 = vmin.f32 %v752, 6.0
      %v817 = vmin.f32 %v753, 6.0
      %v818 = vmin.f32 %v754, 6.0
      %v819 = vmin.f32 %v755, 6.0
      %v820 = vmin.f32 %v756, 6.0
      %v821 = vmin.f32 %v757, 6.0
      %v822 = vmin.f32 %v758, 6.0
      %v823 = vmin.f32 %v759, 6.0
      %v824 = vmin.f32 %v760, 6.0
      %v825 = vmin.f32 %v761, 6.0
      %v826 = vmin.f32 %v762, 6.0
      %v827 = vmin.f32 %v763, 6.0
      %v828 = vmin.f32 %v764, 6.0
      %v829 = vmin.f32 %v765, 6.0
      %v830 = vmin.f32 %v766, 6.0
      %v831 = vmin.f32 %v767, 6.0
      %v832 = vmin.f32 %v768, 6.0
      %v833 = vmin.f32 %v769, 6.0
      %v834 = vmin.f32 %v770, 6.0
      %v835 = vmin.f32 %v771, 6.0
      %v836 = vmin.f32 %v772, 6.0
      %v837 = vmin.f32 %v773, 6.0
      %v838 = vmin.f32 %v774, 6.0
      %v839 = vmin.f32 %v775, 6.0
      %v840 = vmin.f32 %v776, 6.0
      %v841 = vmin.f32 %v777, 6.0
      %v842 = vmin.f32 %v778, 6.0
      %v843 = vmin.f32 %v779, 6.0
      %v844 = vmin.f32 %v780, 6.0
      %v845 = vmin.f32 %v781, 6.0
      %v846 = vmin.f32 %v782, 6.0
      %v847 = vmin.f32 %v783, 6.0
      %v848 = vmin.f32 %v784, 6.0
      %v849 = vmin.f32 %v785, 6.0
      %v850 = vmin.f32 %v786, 6.0
      %v851 = vmin.f32 %v787, 6.0
      %v852 = vmin.f32 %v788, 6.0
      %v853 = vmin.f32 %v789, 6.0
      %v854 = vmin.f32 %v790, 6.0
      %v855 = vmin.f32 %v791, 6.0
      %v856 = vmin.f32 %v792, 6.0
      %v857 = vmin.f32 %v793, 6.0
      %v858 = vmin.f32 %v794, 6.0
      %v859 = vmin.f32 %v795, 6.0
      %v860 = vmin.f32 %v796, 6.0
      %v861 = vmin.f32 %v797, 6.0
      %v862 = vmin.f32 %v798, 6.0
      %v863 = vmin.f32 %v799, 6.0
      %v864 = vmin.f32 %v800, 6.0
      %v865 = vmin.f32 %v801, 6.0
      %v866 = vmin.f32 %v802, 6.0
      %v867 = vmin.f32 %v803, 6.0
      %v868 = vmin.f32 %v804, 6.0
      %v869 = vmin.f32 %v805, 6.0
      %v870 = vpack.c.bf16 %v806, %v806
      %v871 = vpack.c.bf16 %v807, %v807
      %v872 = vpack.c.bf16 %v808, %v808
      %v873 = vpack.c.bf16 %v809, %v809
      %v874 = vpack.c.bf16 %v810, %v810
      %v875 = vpack.c.bf16 %v811, %v811
      %v876 = vpack.c.bf16 %v812, %v812
      %v877 = vpack.c.bf16 %v813, %v813
      %v878 = vpack.c.bf16 %v814, %v814
      %v879 = vpack.c.bf16 %v815, %v815
      %v880 = vpack.c.bf16 %v816, %v816
      %v881 = vpack.c.bf16 %v817, %v817
      %v882 = vpack.c.bf16 %v818, %v818
      %v883 = vpack.c.bf16 %v819, %v819
      %v884 = vpack.c.bf16 %v820, %v820
      %v885 = vpack.c.bf16 %v821, %v821
      %v886 = vpack.c.bf16 %v822, %v822
      %v887 = vpack.c.bf16 %v823, %v823
      %v888 = vpack.c.bf16 %v824, %v824
      %v889 = vpack.c.bf16 %v825, %v825
      %v890 = vpack.c.bf16 %v826, %v826
      %v891 = vpack.c.bf16 %v827, %v827
      %v892 = vpack.c.bf16 %v828, %v828
      %v893 = vpack.c.bf16 %v829, %v829
      %v894 = vpack.c.bf16 %v830, %v830
      %v895 = vpack.c.bf16 %v831, %v831
      %v896 = vpack.c.bf16 %v832, %v832
      %v897 = vpack.c.bf16 %v833, %v833
      %v898 = vpack.c.bf16 %v834, %v834
      %v899 = vpack.c.bf16 %v835, %v835
      %v900 = vpack.c.bf16 %v836, %v836
      %v901 = vpack.c.bf16 %v837, %v837
      %v902 = vpack.c.bf16 %v838, %v838
      %v903 = vpack.c.bf16 %v839, %v839
      %v904 = vpack.c.bf16 %v840, %v840
      %v905 = vpack.c.bf16 %v841, %v841
      %v906 = vpack.c.bf16 %v842, %v842
      %v907 = vpack.c.bf16 %v843, %v843
      %v908 = vpack.c.bf16 %v844, %v844
      %v909 = vpack.c.bf16 %v845, %v845
      %v910 = vpack.c.bf16 %v846, %v846
      %v911 = vpack.c.bf16 %v847, %v847
      %v912 = vpack.c.bf16 %v848, %v848
      %v913 = vpack.c.bf16 %v849, %v849
      %v914 = vpack.c.bf16 %v850, %v850
      %v915 = vpack.c.bf16 %v851, %v851
      %v916 = vpack.c.bf16 %v852, %v852
      %v917 = vpack.c.bf16 %v853, %v853
      %v918 = vpack.c.bf16 %v854, %v854
      %v919 = vpack.c.bf16 %v855, %v855
      %v920 = vpack.c.bf16 %v856, %v856
      %v921 = vpack.c.bf16 %v857, %v857
      %v922 = vpack.c.bf16 %v858, %v858
      %v923 = vpack.c.bf16 %v859, %v859
      %v924 = vpack.c.bf16 %v860, %v860
      %v925 = vpack.c.bf16 %v861, %v861
      %v926 = vpack.c.bf16 %v862, %v862
      %v927 = vpack.c.bf16 %v863, %v863
      %v928 = vpack.c.bf16 %v864, %v864
      %v929 = vpack.c.bf16 %v865, %v865
      %v930 = vpack.c.bf16 %v866, %v866
      %v931 = vpack.c.bf16 %v867, %v867
      %v932 = vpack.c.bf16 %v868, %v868
      %v933 = vpack.c.bf16 %v869, %v869
      %vm934 = vcmask 257024
      %935 = vst.msk [vmem:[%s223] sm:$0xf] %vm934, %v870
      %936 = vst.msk [vmem:[%s223 + $0x4] sm:$0xf] %vm934, %v871
      %937 = vst.msk [vmem:[%s223 + $0x8] sm:$0xf] %vm934, %v872
      %938 = vst.msk [vmem:[%s223 + $0xc] sm:$0xf] %vm934, %v873
      %939 = vst.msk [vmem:[%s223 + $0x10] sm:$0xf] %vm934, %v874
      %940 = vst.msk [vmem:[%s223 + $0x14] sm:$0xf] %vm934, %v875
      %941 = vst.msk [vmem:[%s223 + $0x18] sm:$0xf] %vm934, %v876
      %942 = vst.msk [vmem:[%s223 + $0x1c] sm:$0xf] %vm934, %v877
      %943 = vst.msk [vmem:[%s223 + $0x20] sm:$0xf] %vm934, %v878
      %944 = vst.msk [vmem:[%s223 + $0x24] sm:$0xf] %vm934, %v879
      %945 = vst.msk [vmem:[%s223 + $0x28] sm:$0xf] %vm934, %v880
      %946 = vst.msk [vmem:[%s223 + $0x2c] sm:$0xf] %vm934, %v881
      %947 = vst.msk [vmem:[%s223 + $0x30] sm:$0xf] %vm934, %v882
      %948 = vst.msk [vmem:[%s223 + $0x34] sm:$0xf] %vm934, %v883
      %949 = vst.msk [vmem:[%s223 + $0x38] sm:$0xf] %vm934, %v884
      %950 = vst.msk [vmem:[%s223 + $0x3c] sm:$0xf] %vm934, %v885
      %951 = vst.msk [vmem:[%s223 + $0x40] sm:$0xf] %vm934, %v886
      %952 = vst.msk [vmem:[%s223 + $0x44] sm:$0xf] %vm934, %v887
      %953 = vst.msk [vmem:[%s223 + $0x48] sm:$0xf] %vm934, %v888
      %954 = vst.msk [vmem:[%s223 + $0x4c] sm:$0xf] %vm934, %v889
      %955 = vst.msk [vmem:[%s223 + $0x50] sm:$0xf] %vm934, %v890
      %956 = vst.msk [vmem:[%s223 + $0x54] sm:$0xf] %vm934, %v891
      %957 = vst.msk [vmem:[%s223 + $0x58] sm:$0xf] %vm934, %v892
      %958 = vst.msk [vmem:[%s223 + $0x5c] sm:$0xf] %vm934, %v893
      %959 = vst.msk [vmem:[%s223 + $0x60] sm:$0xf] %vm934, %v894
      %960 = vst.msk [vmem:[%s223 + $0x64] sm:$0xf] %vm934, %v895
      %961 = vst.msk [vmem:[%s223 + $0x68] sm:$0xf] %vm934, %v896
      %962 = vst.msk [vmem:[%s223 + $0x6c] sm:$0xf] %vm934, %v897
      %963 = vst.msk [vmem:[%s223 + $0x70] sm:$0xf] %vm934, %v898
      %964 = vst.msk [vmem:[%s223 + $0x74] sm:$0xf] %vm934, %v899
      %965 = vst.msk [vmem:[%s223 + $0x78] sm:$0xf] %vm934, %v900
      %966 = vst.msk [vmem:[%s223 + $0x7c] sm:$0xf] %vm934, %v901
      %967 = vst.msk [vmem:[%s223 + $0x80] sm:$0xf] %vm934, %v902
      %968 = vst.msk [vmem:[%s223 + $0x84] sm:$0xf] %vm934, %v903
      %969 = vst.msk [vmem:[%s223 + $0x88] sm:$0xf] %vm934, %v904
      %970 = vst.msk [vmem:[%s223 + $0x8c] sm:$0xf] %vm934, %v905
      %971 = vst.msk [vmem:[%s223 + $0x90] sm:$0xf] %vm934, %v906
      %972 = vst.msk [vmem:[%s223 + $0x94] sm:$0xf] %vm934, %v907
      %973 = vst.msk [vmem:[%s223 + $0x98] sm:$0xf] %vm934, %v908
      %974 = vst.msk [vmem:[%s223 + $0x9c] sm:$0xf] %vm934, %v909
      %975 = vst.msk [vmem:[%s223 + $0xa0] sm:$0xf] %vm934, %v910
      %976 = vst.msk [vmem:[%s223 + $0xa4] sm:$0xf] %vm934, %v911
      %977 = vst.msk [vmem:[%s223 + $0xa8] sm:$0xf] %vm934, %v912
      %978 = vst.msk [vmem:[%s223 + $0xac] sm:$0xf] %vm934, %v913
      %979 = vst.msk [vmem:[%s223 + $0xb0] sm:$0xf] %vm934, %v914
      %980 = vst.msk [vmem:[%s223 + $0xb4] sm:$0xf] %vm934, %v915
      %981 = vst.msk [vmem:[%s223 + $0xb8] sm:$0xf] %vm934, %v916
      %982 = vst.msk [vmem:[%s223 + $0xbc] sm:$0xf] %vm934, %v917
      %983 = vst.msk [vmem:[%s223 + $0xc0] sm:$0xf] %vm934, %v918
      %984 = vst.msk [vmem:[%s223 + $0xc4] sm:$0xf] %vm934, %v919
      %985 = vst.msk [vmem:[%s223 + $0xc8] sm:$0xf] %vm934, %v920
      %986 = vst.msk [vmem:[%s223 + $0xcc] sm:$0xf] %vm934, %v921
      %987 = vst.msk [vmem:[%s223 + $0xd0] sm:$0xf] %vm934, %v922
      %988 = vst.msk [vmem:[%s223 + $0xd4] sm:$0xf] %vm934, %v923
      %989 = vst.msk [vmem:[%s223 + $0xd8] sm:$0xf] %vm934, %v924
      %990 = vst.msk [vmem:[%s223 + $0xdc] sm:$0xf] %vm934, %v925
      %991 = vst.msk [vmem:[%s223 + $0xe0] sm:$0xf] %vm934, %v926
      %992 = vst.msk [vmem:[%s223 + $0xe4] sm:$0xf] %vm934, %v927
      %993 = vst.msk [vmem:[%s223 + $0xe8] sm:$0xf] %vm934, %v928
      %994 = vst.msk [vmem:[%s223 + $0xec] sm:$0xf] %vm934, %v929
      %995 = vst.msk [vmem:[%s223 + $0xf0] sm:$0xf] %vm934, %v930
      %996 = vst.msk [vmem:[%s223 + $0xf4] sm:$0xf] %vm934, %v931
      %997 = vst.msk [vmem:[%s223 + $0xf8] sm:$0xf] %vm934, %v932
      %998 = vst.msk [vmem:[%s223 + $0xfc] sm:$0xf] %vm934, %v933
      %s999 = smul.u32 64, %s18
      %p1000 = scmp.lt.s32.totalorder %s999, 255
      %s1001 = scalar_select %p1000, %s999, 255
      %p1002 = scmp.lt.s32.totalorder %s19, 0
      %s1003 = scalar_select %p1002, %s19, 0
      %s1004 = sadd.s32 %s1003, %s1001
      %s1005 = smul.addr %s1004, 4
      %s1006 = scalar_lea.vmem %s3, %s1005
      // Predicated region
      $region33: #{tpu_custom_call.1} parent=31 // pred_check
        %p1007 = pneg %p124
      $region34: #{tpu_custom_call.1} parent=31 // pred_check_branch
        %1009 = sbr.rel (%p1007) target = $region36
      $region35: #{tpu_custom_call.1} parent=31 // pred_region
        %s1010 = smul.u32 64, %s18
      $region36: #{tpu_custom_call.1} parent=31 // pred_fallthru
        _
    $region32: #{tpu_custom_call.1} parent=5 // pred_fallthru
      _
    %p1011 = scmp.le.s32.totalorder 2, %s9
    // Predicated region
    $region37: #{tpu_custom_call.1} parent=5 // pred_check
      %p1012 = pneg %p1011
    $region38: #{tpu_custom_call.1} parent=5 // pred_check_branch
      %1014 = sbr.rel (%p1012) target = $region40
    $region39: #{tpu_custom_call.1} parent=5 // pred_region
      %s1015 = ssub.s32 %s9, 2
      // Predicated region
      $region41: #{tpu_custom_call.1} parent=39 // pred_check
        %p1016 = pneg %p130
      $region42: #{tpu_custom_call.1} parent=39 // pred_check_branch
        %1018 = sbr.rel (%p1016) target = $region44
      $region43: #{tpu_custom_call.1} parent=39 // pred_region
        %s1019 = smul.u32 64, %s20
        %p1020 = scmp.lt.s32.totalorder %s1019, 255
        %s1021 = scalar_select %p1020, %s1019, 255
        %p1022 = scmp.lt.s32.totalorder %s21, 0
        %s1023 = scalar_select %p1022, %s21, 0
        %s1024 = sadd.s32 %s1023, %s1021
        %s1025 = smul.addr %s1024, 4
        %s1026 = scalar_lea.vmem %s3, %s1025
      $region44: #{tpu_custom_call.1} parent=39 // pred_fallthru
        _
    $region40: #{tpu_custom_call.1} parent=5 // pred_fallthru
      _
  $region6: #{tpu_custom_call.1} parent=0 // loop_footer
    %s13 = sadd.s32 1, %s9
  $region7: #{tpu_custom_call.1} parent=0 // loop_footer_branch
    %8 = sbr.rel target = $region3
  $region8: #{tpu_custom_call.1} parent=0 // loop_exit
    _

</llo_original>
